<compile_context>
chip_gen: v6e
topology: v6e:2x2x1
jax: 0.10.0
libtpu: 0.0.40
codegen_flags: <defaults>
</compile_context>

<pallas_src>
import jax
import jax.numpy as jnp
from jax.experimental import pallas as pl
from jax.experimental.pallas import tpu as pltpu


def attention_kernel(x_ref, w_ref, rep_ref, att_ref):
    i = pl.program_id(0)
    n_tiles = pl.num_programs(0)
    tile_n = x_ref.shape[0]

    x = x_ref[...]                                   # (tile_n, H) f32
    w = w_ref[...]                                   # (1, H)      f32

    # One pass over the tile: scores and row-sums together (VPU mul + XLU lane-reduce).
    score = jnp.maximum(jnp.sum(x * w, axis=1, keepdims=True), 0.0)   # (tile_n, 1)
    rowsum = jnp.sum(x, axis=1, keepdims=True)                        # (tile_n, 1)

    # Stage per-row scalars in the resident output blocks (att <- scores, rep <- rowsums).
    r0 = pl.multiple_of(i * tile_n, tile_n)
    att_ref[pl.ds(r0, tile_n), :] = score
    rep_ref[pl.ds(r0, tile_n), :] = rowsum

    # Finalize once every row has been scored: softmax over N + weighted pooling.
    @pl.when(i == n_tiles - 1)
    def _finalize():
        s = att_ref[...]                                  # (N, 1) relu'd scores
        m = jnp.max(s, axis=0, keepdims=True)             # (1, 1)
        e = jnp.exp(s - m)
        denom = jnp.sum(e, axis=0, keepdims=True)         # (1, 1)
        # Single fused normalization; the reference's second renorm is a no-op.
        att = e * pl.reciprocal(denom, approx=False)
        att_ref[...] = att
        rep_ref[...] = att * rep_ref[...]                 # rep_i = att_i * rowsum_i


def _pick_tile_n(n, h, max_tile_bytes=4 * 1024 * 1024):
    """Largest row tile that divides N, is a multiple of 8, and keeps one
    (tile_n, H) f32 buffer <= 4 MiB so the double-buffered pipeline fits VMEM
    on every TPU generation (v7x only has 64 MiB physical / 32 MiB scoped)."""
    if n % 8 != 0:
        return n  # single full-size block (block dims == array dims is always legal)
    for cand in (2048, 1024, 512, 256, 128, 64, 32, 16, 8):
        if n % cand == 0 and cand * h * 4 <= max_tile_bytes:
            return cand
    return 8


def attention_forward(inputs, att_weights, lengths=None, *, tile_n=None):
    """inputs: (N, H) f32, att_weights: (1, H) f32. `lengths` is unused (as in the
    reference forward). Returns (representations (N,), attentions (N,))."""
    del lengths  # never used by the PyTorch forward
    inputs = jnp.asarray(inputs, jnp.float32)
    att_weights = jnp.asarray(att_weights, jnp.float32).reshape(1, -1)
    n, h = inputs.shape
    if tile_n is None:
        tile_n = _pick_tile_n(n, h)
    assert n % tile_n == 0, "tile_n must divide N"
    num_tiles = n // tile_n

    # TODO(synk): outputs are kept as (N, 1) columns (lane-sparse); a lane-dense (1, N)
    # layout would require an in-kernel sublane->lane transpose, and the one-time
    # 2*N*4 B writeback is negligible next to the N*H*4 B input stream.
    rep, att = pl.pallas_call(
        attention_kernel,
        out_shape=(
            jax.ShapeDtypeStruct((n, 1), jnp.float32),   # representations
            jax.ShapeDtypeStruct((n, 1), jnp.float32),   # attentions
        ),
        grid_spec=pltpu.PrefetchScalarGridSpec(
            num_scalar_prefetch=0,
            grid=(num_tiles,),
            in_specs=[
                pl.BlockSpec((tile_n, h), lambda i: (i, 0)),   # stream x row-tiles
                pl.BlockSpec((1, h), lambda i: (0, 0)),        # w stays resident
            ],
            out_specs=(
                pl.BlockSpec((n, 1), lambda i: (0, 0)),        # rep resident (rowsum stage)
                pl.BlockSpec((n, 1), lambda i: (0, 0)),        # att resident (score stage)
            ),
        ),
        compiler_params=pltpu.CompilerParams(
            # softmax over N is a global reduction -> the single grid axis must run
            # sequentially ("arbitrary"); it cannot be megacore-parallel.
            dimension_semantics=("arbitrary",),
            vmem_limit_bytes=32 * 1024 * 1024,
        ),
    )(inputs, att_weights)
    return rep.reshape(n), att.reshape(n)


def _reference(inputs, att_weights):
    scores = jnp.maximum(inputs @ att_weights.T, 0.0)[:, 0]    # (N,)
    att = jax.nn.softmax(scores, axis=-1)
    att = att / jnp.sum(att)              # redundant renorm, as in the PyTorch code
    rep = jnp.sum(inputs * att[:, None], axis=1)
    return rep, att


def _run_case(key, n, h, tile_n=None):
    k_x, k_w = jax.random.split(key)
    inputs = jax.random.normal(k_x, (n, h), dtype=jnp.float32)
    stdv = 1.0 / jnp.sqrt(jnp.float32(h))
    att_weights = jax.random.uniform(k_w, (1, h), minval=-stdv, maxval=stdv,
                                     dtype=jnp.float32)
    lengths = jnp.full((n,), h, dtype=jnp.int32)    # unused, API parity only
    rep, att = attention_forward(inputs, att_weights, lengths, tile_n=tile_n)
    jax.block_until_ready((rep, att))
    rep_ref, att_ref = _reference(inputs, att_weights)
    assert rep.shape == (n,) and att.shape == (n,)
    assert jnp.allclose(att, att_ref, atol=1e-6, rtol=1e-5), "attentions mismatch"
    assert jnp.allclose(rep, rep_ref, atol=1e-5, rtol=1e-5), "representations mismatch"


if __name__ == "__main__":
    key = jax.random.PRNGKey(0)
    k0, k1 = jax.random.split(key)
    # Small shape matching the module's intended use (N rows of hidden size H).
    _run_case(k0, n=8, h=32)
    # Multi-tile path: 4 grid steps of (8, 128) tiles exercising the pipelined grid.
    _run_case(k1, n=32, h=128, tile_n=8)
    print("KERNEL_OK")
</pallas_src>

<mosaic_0001>
module attributes {stable_mosaic.version = 11 : i64} {
  func.func @attention_kernel(%arg0: i32, %arg1: memref<8x32xf32, #tpu.memory_space<vmem>>, %arg2: memref<1x32xf32, #tpu.memory_space<vmem>>, %arg3: memref<8x1xf32, #tpu.memory_space<vmem>>, %arg4: memref<8x1xf32, #tpu.memory_space<vmem>>) attributes {dimension_semantics = [#tpu.dimension_semantics<arbitrary>], iteration_bounds = array<i64: 1>, scalar_prefetch = 0 : i64, scratch_operands = 0 : i64, tpu.core_type = #tpu.core_type<tc>, window_params = [{transform_indices = @transform_0, window_bounds = array<i64: 8, 32>}, {pipeline_mode = #tpu.pipeline_mode<synchronous>, transform_indices = @transform_1, window_bounds = array<i64: 1, 32>}, {pipeline_mode = #tpu.pipeline_mode<synchronous>, transform_indices = @transform_2, window_bounds = array<i64: 8, 1>}, {pipeline_mode = #tpu.pipeline_mode<synchronous>, transform_indices = @transform_3, window_bounds = array<i64: 8, 1>}]} {
    %c0 = arith.constant 0 : index
    %c0_0 = arith.constant 0 : index
    %0 = vector.load %arg1[%c0, %c0_0] : memref<8x32xf32, #tpu.memory_space<vmem>>, vector<8x32xf32>
    %c0_1 = arith.constant 0 : index
    %c0_2 = arith.constant 0 : index
    %1 = vector.load %arg2[%c0_1, %c0_2] : memref<1x32xf32, #tpu.memory_space<vmem>>, vector<1x32xf32>
    %2 = vector.broadcast %1 : vector<1x32xf32> to vector<8x32xf32>
    %3 = arith.mulf %0, %2 : vector<8x32xf32>
    %cst = arith.constant dense<0.000000e+00> : vector<8xf32>
    %4 = vector.multi_reduction <add>, %3, %cst [1] : vector<8x32xf32> to vector<8xf32>
    %5 = vector.shape_cast %4 : vector<8xf32> to vector<8x1xf32>
    %cst_3 = arith.constant 0.000000e+00 : f32
    %6 = vector.broadcast %cst_3 : f32 to vector<8x1xf32>
    %7 = arith.maximumf %5, %6 : vector<8x1xf32>
    %cst_4 = arith.constant dense<0.000000e+00> : vector<8xf32>
    %8 = vector.multi_reduction <add>, %0, %cst_4 [1] : vector<8x32xf32> to vector<8xf32>
    %9 = vector.shape_cast %8 : vector<8xf32> to vector<8x1xf32>
    %c8_i32 = arith.constant 8 : i32
    %10 = arith.muli %arg0, %c8_i32 : i32
    %11 = tpu.assume_multiple %10, 8 : i32
    %12 = arith.index_cast %11 : i32 to index
    %c0_5 = arith.constant 0 : index
    %13 = vector.load %arg4[%12, %c0_5] : memref<8x1xf32, #tpu.memory_space<vmem>>, vector<8x1xf32>
    tpu.vector_store %arg4[%12, %c0_5], %7 {strides = array<i32>} : memref<8x1xf32, #tpu.memory_space<vmem>>, vector<8x1xf32>,
    %14 = arith.index_cast %11 : i32 to index
    %c0_6 = arith.constant 0 : index
    %15 = vector.load %arg3[%14, %c0_6] : memref<8x1xf32, #tpu.memory_space<vmem>>, vector<8x1xf32>
    tpu.vector_store %arg3[%14, %c0_6], %9 {strides = array<i32>} : memref<8x1xf32, #tpu.memory_space<vmem>>, vector<8x1xf32>,
    %c0_i32 = arith.constant 0 : i32
    %16 = arith.cmpi eq, %arg0, %c0_i32 : i32
    %17 = arith.extui %16 : i1 to i32
    %c0_i32_7 = arith.constant 0 : i32
    %18 = arith.cmpi ne, %17, %c0_i32_7 : i32
    scf.if %18 {
      %c0_8 = arith.constant 0 : index
      %c0_9 = arith.constant 0 : index
      %19 = vector.load %arg4[%c0_8, %c0_9] : memref<8x1xf32, #tpu.memory_space<vmem>>, vector<8x1xf32>
      %cst_10 = arith.constant dense<0xFF800000> : vector<1xf32>
      %20 = vector.multi_reduction <maximumf>, %19, %cst_10 [0] : vector<8x1xf32> to vector<1xf32>
      %21 = vector.shape_cast %20 : vector<1xf32> to vector<1x1xf32>
      %22 = vector.broadcast %21 : vector<1x1xf32> to vector<8x1xf32>
      %23 = arith.subf %19, %22 : vector<8x1xf32>
      %24 = math.exp %23 : vector<8x1xf32>
      %cst_11 = arith.constant dense<0.000000e+00> : vector<1xf32>
      %25 = vector.multi_reduction <add>, %24, %cst_11 [0] : vector<8x1xf32> to vector<1xf32>
      %26 = vector.shape_cast %25 : vector<1xf32> to vector<1x1xf32>
      %27 = tpu.reciprocal %26 : vector<1x1xf32> -> vector<1x1xf32>
      %28 = vector.broadcast %27 : vector<1x1xf32> to vector<8x1xf32>
      %29 = arith.mulf %24, %28 : vector<8x1xf32>
      %c0_12 = arith.constant 0 : index
      %c0_13 = arith.constant 0 : index
      %30 = vector.load %arg4[%c0_12, %c0_13] : memref<8x1xf32, #tpu.memory_space<vmem>>, vector<8x1xf32>
      tpu.vector_store %arg4[%c0_12, %c0_13], %29 {strides = array<i32>} : memref<8x1xf32, #tpu.memory_space<vmem>>, vector<8x1xf32>,
      %c0_14 = arith.constant 0 : index
      %c0_15 = arith.constant 0 : index
      %31 = vector.load %arg3[%c0_14, %c0_15] : memref<8x1xf32, #tpu.memory_space<vmem>>, vector<8x1xf32>
      %32 = arith.mulf %29, %31 : vector<8x1xf32>
      %c0_16 = arith.constant 0 : index
      %c0_17 = arith.constant 0 : index
      %33 = vector.load %arg3[%c0_16, %c0_17] : memref<8x1xf32, #tpu.memory_space<vmem>>, vector<8x1xf32>
      tpu.vector_store %arg3[%c0_16, %c0_17], %32 {strides = array<i32>} : memref<8x1xf32, #tpu.memory_space<vmem>>, vector<8x1xf32>,
    } else {
    }
    return
  }
  func.func @transform_0(%arg0: i32) -> (i32, i32) {
    %c0_i32 = arith.constant 0 : i32
    %c0_i32_0 = arith.constant 0 : i32
    return %arg0, %c0_i32 : i32, i32
  }
  func.func @transform_1(%arg0: i32) -> (i32, i32) {
    %c0_i32 = arith.constant 0 : i32
    %c0_i32_0 = arith.constant 0 : i32
    %c0_i32_1 = arith.constant 0 : i32
    return %c0_i32, %c0_i32_0 : i32, i32
  }
  func.func @transform_2(%arg0: i32) -> (i32, i32) {
    %c0_i32 = arith.constant 0 : i32
    %c0_i32_0 = arith.constant 0 : i32
    %c0_i32_1 = arith.constant 0 : i32
    return %c0_i32, %c0_i32_0 : i32, i32
  }
  func.func @transform_3(%arg0: i32) -> (i32, i32) {
    %c0_i32 = arith.constant 0 : i32
    %c0_i32_0 = arith.constant 0 : i32
    %c0_i32_1 = arith.constant 0 : i32
    return %c0_i32, %c0_i32_0 : i32, i32
  }
}

</mosaic_0001>

<llo_original>
// kernel: tpu_custom_call.1
$region0: #{tpu_custom_call.1}
  #allocation0 [shape = 'u32[]', space=smem, size = 0x4, offset = 0x4, fixed_abs, tag = 'smem constant byte address 0x4 - core index']
  #allocation1 [shape = 'u32[144,128]{1,0:T(1,128)}', space=vmem, size = 0x12000, scoped, tag = 'internal scratch']
  %s0 = inlined_call_operand.hbm [shape: f32[8,32], index: 0, kind: input, shape index: {}]
  %s1 = inlined_call_operand.vmem [shape: f32[1,32], index: 1, kind: input, shape index: {}]
  %s2 = inlined_call_operand.vmem [shape: f32[8,1], index: 2, kind: output, shape index: {0}]
  %s3 = inlined_call_operand.vmem [shape: f32[8,1], index: 3, kind: output, shape index: {1}]
  %4 = xla_tuple %s2, %s3
  %s5 = sld [smem:[#allocation0]]
  $region34: #{tpu_custom_call.1} parent=0
    _
  %s7 = ssub.s32 1, %s5
  %s8 = scalar_select 0, %s7, %s5
  $region1: #{tpu_custom_call.1} parent=0
    #allocation2 [shape = 'u8[4096]{0}', space=vmem, size = 0x1000, scoped, tag = 'input window, operand 0, single buffered']
    #allocation3 [shape = 's32[1]{0}', space=sflag, size = 0x4, scoped, tag = 'scoped memory for tpu_custom_call.1']
    %9 = vsyncpa [#allocation3], 0
    // Predicated region
    $region2: #{tpu_custom_call.1} parent=1 // pred_check
      _
    $region3: #{tpu_custom_call.1} parent=1 // pred_check_branch
      %11 = sbr.rel (0) target = $region5
    $region4: #{tpu_custom_call.1} parent=1 // pred_region
      %s13 = ssub.s32 128, 128
      %14 = vsyncadd [#allocation3], %s13
      %s16 = sshll.u32 [#allocation2], 4
      %s17 = int_to_ptr.vmem [resolvable:$true] %s16
      %19 = dma.hbm_to_vmem [thread:$0]  %s0, 128, %s17, [#allocation3]
    $region5: #{tpu_custom_call.1} parent=1 // pred_fallthru
      _
    // Predicated region
    $region6: #{tpu_custom_call.1} parent=1 // pred_check
      _
    $region7: #{tpu_custom_call.1} parent=1 // pred_check_branch
      %21 = sbr.rel (0) target = $region9
    $region8: #{tpu_custom_call.1} parent=1 // pred_region
      _
    $region9: #{tpu_custom_call.1} parent=1 // pred_fallthru
      _
    // Predicated region
    $region10: #{tpu_custom_call.1} parent=1 // pred_check
      _
    $region11: #{tpu_custom_call.1} parent=1 // pred_check_branch
      %23 = sbr.rel (0) target = $region13
    $region12: #{tpu_custom_call.1} parent=1 // pred_region
      %24 = dma.done [#allocation3], 128
    $region13: #{tpu_custom_call.1} parent=1 // pred_fallthru
      _
    %v25 = vld [vmem:[#allocation2] sm:$0xff]
    %v26 = vld [vmem:[%s1] sm:$0x1]
    %v28 = vlaneseq
    %v29 = vshrl.u32 %v28, 7
    %v30 = vsub.s32 0, %v29
    %v31 = vrot.slane %v26, %v30
    %v33 = vmul.f32 %v25, %v31
    %vm34 = vcmask 261120
    %v35 = vsel %vm34, %v33, 0.0
    %36 = vadd.xlane.f32.xlu0 %v35
    %v37 = vpop.xlane.xlu0 %36
    %v38 = vmax.f32 %v37, 0.0
    %v39 = vsel %vm34, %v25, 0.0
    %40 = vadd.xlane.f32.xlu0 %v39
    %v41 = vpop.xlane.xlu0 %40
    %s42 = smul.u32 0, 8
    %s43 = scalar_lea.vmem %s3, %s42
    %vm44 = vcmask 7168
    %45 = vst.msk [vmem:[%s43] sm:$0xff] %vm44, %v38
    %s46 = scalar_lea.vmem %s2, %s42
    %47 = vst.msk [vmem:[%s46] sm:$0xff] %vm44, %v41
    %p48 = scmp.eq.s32.totalorder 0, 0
    // Predicated region
    $region14: #{tpu_custom_call.1} parent=1 // pred_check
      %p49 = pneg %p48
    $region15: #{tpu_custom_call.1} parent=1 // pred_check_branch
      %51 = sbr.rel (%p49) target = $region17
    $region16: #{tpu_custom_call.1} parent=1 // pred_region
      %v52 = vld [vmem:[%s3] sm:$0xff]
      %v53 = vsel %vm44, %v52, -inf
      %v54 = vrot.slane %v53, 4
      %v55 = vmax.f32 %v53, %v54
      %v56 = vrot.slane %v55, 2
      %v57 = vmax.f32 %v55, %v56
      %v58 = vrot.slane %v57, 1
      %v59 = vmax.f32 %v57, %v58
      %v60 = vsub.f32 %v52, %v59
      %v61 = vmul.f32 %v60, 1.442695
      %v62 = vpow.pop %v61
      %v63 = vsel %vm44, %v62, 0.0
      %v64 = vrot.slane %v63, 4
      %v65 = vadd.f32 %v63, %v64
      %v66 = vrot.slane %v65, 2
      %v67 = vadd.f32 %v65, %v66
      %v68 = vrot.slane %v67, 1
      %v69 = vadd.f32 %v67, %v68
      %v70 = vrcp.pop %v69
      %v71 = vmul.f32 %v62, %v70
      %72 = vst.msk [vmem:[%s3] sm:$0xff] %vm44, %v71
      %v73 = vld [vmem:[%s2] sm:$0xff]
      %v74 = vmul.f32 %v71, %v73
      %75 = vst.msk [vmem:[%s2] sm:$0xff] %vm44, %v74
    $region17: #{tpu_custom_call.1} parent=1 // pred_fallthru
      _
    // Predicated region
    $region18: #{tpu_custom_call.1} parent=1 // pred_check
      _
    $region19: #{tpu_custom_call.1} parent=1 // pred_check_branch
      %77 = sbr.rel (0) target = $region21
    $region20: #{tpu_custom_call.1} parent=1 // pred_region
      _
    $region21: #{tpu_custom_call.1} parent=1 // pred_fallthru
      _
    // Predicated region
    $region22: #{tpu_custom_call.1} parent=1 // pred_check
      _
    $region23: #{tpu_custom_call.1} parent=1 // pred_check_branch
      %79 = sbr.rel (0) target = $region25
    $region24: #{tpu_custom_call.1} parent=1 // pred_region
      _
    $region25: #{tpu_custom_call.1} parent=1 // pred_fallthru
      _
    // Predicated region
    $region26: #{tpu_custom_call.1} parent=1 // pred_check
      _
    $region27: #{tpu_custom_call.1} parent=1 // pred_check_branch
      %81 = sbr.rel (0) target = $region29
    $region28: #{tpu_custom_call.1} parent=1 // pred_region
      _
    $region29: #{tpu_custom_call.1} parent=1 // pred_fallthru
      _
    // Predicated region
    $region30: #{tpu_custom_call.1} parent=1 // pred_check
      _
    $region31: #{tpu_custom_call.1} parent=1 // pred_check_branch
      %83 = sbr.rel (0) target = $region33
    $region32: #{tpu_custom_call.1} parent=1 // pred_region
      _
    $region33: #{tpu_custom_call.1} parent=1 // pred_fallthru
      _
    %84 = vsyncpa [#allocation3], 1

</llo_original>
